<compile_context>
chip_gen: v5e
topology: v5e:2x2
jax: 0.10.0
libtpu: 0.0.40
codegen_flags: <defaults>
</compile_context>

<pallas_src>
from functools import partial

import jax
import jax.numpy as jnp
from jax.experimental import pallas as pl
from jax.experimental.pallas import tpu as pltpu


def _posemb_kernel(idx_ref, tbl_ref, out_ref, *, p):
    """One grid step.

    idx_ref : (1, TR, 2*P) int32 -- fully folded hot-lane targets:
              cols [0:P]   = j*K + (pos %  NS)   (spatio hot lane, sub-pos j)
              cols [P:2*P] = j*K + NS + (pos//NS) (temporal hot lane, sub-pos j)
    tbl_ref : (P*K, P*D)         -- block-diagonal replicated [spatio; temporal]
    out_ref : (TR, P*D)          -- lane-dense output tile
    """
    idx = idx_ref[0]                                    # (TR, 2P) int32
    tr = idx.shape[0]
    pk = tbl_ref.shape[0]

    lane_iota = jax.lax.broadcasted_iota(jnp.int32, (tr, pk), 1)

    # Two-hot mask: seeded from the first compare; all additive offsets are
    # already folded into idx by the wrapper, so each term is one compare.
    hot = lane_iota == idx[:, 0:1]
    hot |= lane_iota == idx[:, p:p + 1]
    for j in range(1, p):                               # static unroll, P <= 16
        hot |= lane_iota == idx[:, j:j + 1]
        hot |= lane_iota == idx[:, p + j:p + j + 1]

    # Single MXU matmul produces the lane-dense (TR, P*D) tile directly.
    # HIGHEST precision keeps an f32 table bit-faithful (multi-pass) instead
    # of a silent single bf16 pass; for a bf16 table it is a single pass.
    out = jnp.dot(hot.astype(tbl_ref.dtype), tbl_ref[...],
                  precision=jax.lax.Precision.HIGHEST,
                  preferred_element_type=jnp.float32)
    out_ref[...] = out.astype(out_ref.dtype)


def factorized_pos_embedding(positions, spatio_table, temporal_table, *,
                             block_n=8192, table_dtype=None):
    """positions (any int shape) -> positions.shape + (D,).

    table_dtype: optional compute/output dtype for the tables (e.g.
      jnp.bfloat16 when the consumer is a bf16 model): halves the dominant
      HBM writeback and turns the gather into a single MXU pass.  Result is
      exact up to the table cast.
    """
    orig_shape = positions.shape
    num_spatio, emb_dim = spatio_table.shape
    num_temporal, emb_dim2 = temporal_table.shape
    assert emb_dim == emb_dim2
    k = num_spatio + num_temporal

    dtype = table_dtype if table_dtype is not None else spatio_table.dtype
    itemsize = jnp.dtype(dtype).itemsize

    # Packing factor: P consecutive positions per output row -> P*D lanes.
    p = 128 // emb_dim if (emb_dim < 128 and 128 % emb_dim == 0) else 1

    combined = jnp.concatenate([spatio_table, temporal_table],
                               axis=0).astype(dtype)                 # (K, D)
    if p > 1:
        # Block-diagonal P-replicated table: row l = j*K + m carries
        # combined[m] at output columns [j*D, (j+1)*D).
        big_table = jnp.einsum("ij,kd->ikjd", jnp.eye(p, dtype=dtype),
                               combined).reshape(p * k, p * emb_dim)
    else:
        big_table = combined

    pos_flat = positions.reshape(-1).astype(jnp.int32)
    n = pos_flat.shape[0]

    # --- tile sizing -------------------------------------------------------
    unit = 8 * p                                   # keep TR a multiple of 8
    n_unit = pl.cdiv(n, unit) * unit
    blk = min(pl.cdiv(block_n, unit) * unit, n_unit)
    if n_unit >= 2 * unit:
        # Keep at least 2 grid tiles so the "parallel" axis can feed both
        # v7x TensorCores (harmless elsewhere: one extra ~0.35us grid step).
        blk = min(blk, pl.cdiv(pl.cdiv(n_unit, 2), unit) * unit)
    blk = max(blk, unit)
    n_pad = pl.cdiv(n, blk) * blk
    n_tiles = n_pad // blk
    tr = blk // p

    # --- wrapper-side index precomputation (keeps mod/div and offset folding
    #     off the VALU-saturated kernel path) -------------------------------
    pos_flat = jnp.pad(pos_flat, (0, n_pad - n))       # pad with 0 (valid idx)
    sp = pos_flat % num_spatio
    tp = pos_flat // num_spatio + num_spatio
    offs = jnp.arange(p, dtype=jnp.int32) * k          # per-sub-position j*K
    sp_lane = sp.reshape(n_tiles, tr, p) + offs
    tp_lane = tp.reshape(n_tiles, tr, p) + offs
    idx = jnp.concatenate([sp_lane, tp_lane], axis=-1)  # (n_tiles, TR, 2P) i32

    cost = pl.CostEstimate(
        flops=2 * n_pad * k * p * emb_dim,
        transcendentals=0,
        bytes_accessed=(idx.size * 4 + big_table.size * itemsize
                        + n_pad * emb_dim * itemsize))

    params = dict(dimension_semantics=("parallel",))
    # Only very large blocks (>~32k positions/tile) approach the 32 MiB scoped
    # VMEM default; raise the limit then (leave headroom under v7x's 64 MiB).
    vmem_est = 2 * (tr * p * emb_dim * itemsize + tr * 2 * p * 4) \
        + 2 * big_table.size * itemsize
    if vmem_est > 24 * 1024 * 1024:
        params["vmem_limit_bytes"] = int(min(vmem_est * 3 // 2,
                                             48 * 1024 * 1024))

    out = pl.pallas_call(
        partial(_posemb_kernel, p=p),
        out_shape=jax.ShapeDtypeStruct((n_tiles * tr, p * emb_dim), dtype),
        grid_spec=pltpu.PrefetchScalarGridSpec(
            num_scalar_prefetch=0,
            grid=(n_tiles,),
            in_specs=[
                # contiguous hot-lane targets tile
                pl.BlockSpec((1, tr, 2 * p), lambda i: (i, 0, 0)),
                # full table, constant block index -> DMA'd once, resident
                pl.BlockSpec((p * k, p * emb_dim), lambda i: (0, 0)),
            ],
            out_specs=pl.BlockSpec((tr, p * emb_dim), lambda i: (i, 0)),
        ),
        compiler_params=pltpu.CompilerParams(**params),
        cost_estimate=cost,
    )(idx, big_table)

    # Row-major relabel: (n_pad/P, P*D) is exactly (n_pad, D) — no data movement.
    out = out.reshape(n_pad, emb_dim)[:n]
    return out.reshape(*orig_shape, emb_dim)


if __name__ == "__main__":
    # Module hyperparameters (small, consistent with the forward pass).
    num_spatio_embeddings = 16
    num_temporal_embeddings = 8
    embedding_dim = 32

    key = jax.random.PRNGKey(0)
    k_sp, k_tp, k_pos = jax.random.split(key, 3)

    # Deterministic "nn.Embedding" weights: N(0, 1), float32 (PyTorch default init).
    spatio_table = jax.random.normal(
        k_sp, (num_spatio_embeddings, embedding_dim), dtype=jnp.float32)
    temporal_table = jax.random.normal(
        k_tp, (num_temporal_embeddings, embedding_dim), dtype=jnp.float32)

    # positions: (batch=2, seq=8), valid range [0, num_spatio * num_temporal).
    batch, seq = 2, 8
    positions = jax.random.randint(
        k_pos, (batch, seq), 0,
        num_spatio_embeddings * num_temporal_embeddings, dtype=jnp.int32)

    out = jax.block_until_ready(
        factorized_pos_embedding(positions, spatio_table, temporal_table))

    # Pure-JAX reference.
    sp_idx = positions % num_spatio_embeddings
    tp_idx = positions // num_spatio_embeddings
    ref = (jnp.take(spatio_table, sp_idx, axis=0)
           + jnp.take(temporal_table, tp_idx, axis=0))
    assert out.shape == (batch, seq, embedding_dim)
    assert jnp.allclose(out, ref, atol=1e-5, rtol=1e-5)

    # Second check: length not a multiple of the tile and a multi-step grid
    # (exercises the cdiv + padding path and the "parallel" grid).
    pos2 = jax.random.randint(
        jax.random.PRNGKey(1), (2, 300), 0,
        num_spatio_embeddings * num_temporal_embeddings, dtype=jnp.int32)
    out2 = jax.block_until_ready(
        factorized_pos_embedding(pos2, spatio_table, temporal_table, block_n=128))
    ref2 = (jnp.take(spatio_table, pos2 % num_spatio_embeddings, axis=0)
            + jnp.take(temporal_table, pos2 // num_spatio_embeddings, axis=0))
    assert out2.shape == (2, 300, embedding_dim)
    assert jnp.allclose(out2, ref2, atol=1e-5, rtol=1e-5)

    # Third check: optional bf16 table/output path (exact up to the cast).
    out3 = jax.block_until_ready(
        factorized_pos_embedding(pos2, spatio_table, temporal_table,
                                 table_dtype=jnp.bfloat16))
    assert out3.dtype == jnp.bfloat16
    assert jnp.allclose(out3.astype(jnp.float32), ref2, atol=5e-2, rtol=5e-2)

    print("KERNEL_OK")
</pallas_src>

<mosaic_0001>
module attributes {stable_mosaic.version = 11 : i64} {
  func.func @_posemb_kernel(%arg0: i32, %arg1: memref<1x8x8xi32, #tpu.memory_space<vmem>>, %arg2: memref<96x128xf32, #tpu.memory_space<vmem>>, %arg3: memref<8x128xf32, #tpu.memory_space<vmem>>) attributes {dimension_semantics = [#tpu.dimension_semantics<parallel>], iteration_bounds = array<i64: 1>, scalar_prefetch = 0 : i64, scratch_operands = 0 : i64, tpu.core_type = #tpu.core_type<tc>, window_params = [{transform_indices = @transform_0, window_bounds = array<i64: 1, 8, 8>}, {pipeline_mode = #tpu.pipeline_mode<synchronous>, transform_indices = @transform_1, window_bounds = array<i64: 96, 128>}, {transform_indices = @transform_2, window_bounds = array<i64: 8, 128>}]} {
    %c0 = arith.constant 0 : index
    %c0_0 = arith.constant 0 : index
    %c0_1 = arith.constant 0 : index
    %0 = vector.load %arg1[%c0, %c0_0, %c0_1] : memref<1x8x8xi32, #tpu.memory_space<vmem>>, vector<1x8x8xi32>
    %1 = vector.shape_cast %0 : vector<1x8x8xi32> to vector<8x8xi32>
    %2 = tpu.iota {dimensions = array<i32: 1>} : vector<8x96xi32>
    %3 = vector.extract_strided_slice %1 {offsets = [0, 0], sizes = [8, 1], strides = [1, 1]} : vector<8x8xi32> to vector<8x1xi32>
    %4 = vector.broadcast %3 : vector<8x1xi32> to vector<8x96xi32>
    %5 = arith.cmpi eq, %2, %4 : vector<8x96xi32>
    %6 = vector.extract_strided_slice %1 {offsets = [0, 4], sizes = [8, 1], strides = [1, 1]} : vector<8x8xi32> to vector<8x1xi32>
    %7 = vector.broadcast %6 : vector<8x1xi32> to vector<8x96xi32>
    %8 = arith.cmpi eq, %2, %7 : vector<8x96xi32>
    %9 = arith.ori %5, %8 : vector<8x96xi1>
    %10 = vector.extract_strided_slice %1 {offsets = [0, 1], sizes = [8, 1], strides = [1, 1]} : vector<8x8xi32> to vector<8x1xi32>
    %11 = vector.broadcast %10 : vector<8x1xi32> to vector<8x96xi32>
    %12 = arith.cmpi eq, %2, %11 : vector<8x96xi32>
    %13 = arith.ori %9, %12 : vector<8x96xi1>
    %14 = vector.extract_strided_slice %1 {offsets = [0, 5], sizes = [8, 1], strides = [1, 1]} : vector<8x8xi32> to vector<8x1xi32>
    %15 = vector.broadcast %14 : vector<8x1xi32> to vector<8x96xi32>
    %16 = arith.cmpi eq, %2, %15 : vector<8x96xi32>
    %17 = arith.ori %13, %16 : vector<8x96xi1>
    %18 = vector.extract_strided_slice %1 {offsets = [0, 2], sizes = [8, 1], strides = [1, 1]} : vector<8x8xi32> to vector<8x1xi32>
    %19 = vector.broadcast %18 : vector<8x1xi32> to vector<8x96xi32>
    %20 = arith.cmpi eq, %2, %19 : vector<8x96xi32>
    %21 = arith.ori %17, %20 : vector<8x96xi1>
    %22 = vector.extract_strided_slice %1 {offsets = [0, 6], sizes = [8, 1], strides = [1, 1]} : vector<8x8xi32> to vector<8x1xi32>
    %23 = vector.broadcast %22 : vector<8x1xi32> to vector<8x96xi32>
    %24 = arith.cmpi eq, %2, %23 : vector<8x96xi32>
    %25 = arith.ori %21, %24 : vector<8x96xi1>
    %26 = vector.extract_strided_slice %1 {offsets = [0, 3], sizes = [8, 1], strides = [1, 1]} : vector<8x8xi32> to vector<8x1xi32>
    %27 = vector.broadcast %26 : vector<8x1xi32> to vector<8x96xi32>
    %28 = arith.cmpi eq, %2, %27 : vector<8x96xi32>
    %29 = arith.ori %25, %28 : vector<8x96xi1>
    %30 = vector.extract_strided_slice %1 {offsets = [0, 7], sizes = [8, 1], strides = [1, 1]} : vector<8x8xi32> to vector<8x1xi32>
    %31 = vector.broadcast %30 : vector<8x1xi32> to vector<8x96xi32>
    %32 = arith.cmpi eq, %2, %31 : vector<8x96xi32>
    %33 = arith.ori %29, %32 : vector<8x96xi1>
    %34 = arith.extui %33 : vector<8x96xi1> to vector<8x96xi32>
    %35 = arith.sitofp %34 : vector<8x96xi32> to vector<8x96xf32>
    %c0_2 = arith.constant 0 : index
    %c0_3 = arith.constant 0 : index
    %36 = vector.load %arg2[%c0_2, %c0_3] : memref<96x128xf32, #tpu.memory_space<vmem>>, vector<96x128xf32>
    %cst = arith.constant dense<0.000000e+00> : vector<8x128xf32>
    %37 = tpu.matmul %35, %36, %cst {dimension_numbers = #tpu.dot_dimension_numbers<[1], [0], [0], [1], [0, 0, 1, 1], [], []>, precision = #tpu.contract_precision<fp32>} : vector<8x96xf32>, vector<96x128xf32>, vector<8x128xf32> -> vector<8x128xf32>
    %c0_4 = arith.constant 0 : index
    %c0_5 = arith.constant 0 : index
    %38 = vector.load %arg3[%c0_4, %c0_5] : memref<8x128xf32, #tpu.memory_space<vmem>>, vector<8x128xf32>
    tpu.vector_store %arg3[%c0_4, %c0_5], %37 {strides = array<i32>} : memref<8x128xf32, #tpu.memory_space<vmem>>, vector<8x128xf32>,
    return
  }
  func.func @transform_0(%arg0: i32) -> (i32, i32, i32) {
    %c0_i32 = arith.constant 0 : i32
    %c0_i32_0 = arith.constant 0 : i32
    %c0_i32_1 = arith.constant 0 : i32
    return %arg0, %c0_i32, %c0_i32_0 : i32, i32, i32
  }
  func.func @transform_1(%arg0: i32) -> (i32, i32) {
    %c0_i32 = arith.constant 0 : i32
    %c0_i32_0 = arith.constant 0 : i32
    %c0_i32_1 = arith.constant 0 : i32
    return %c0_i32, %c0_i32_0 : i32, i32
  }
  func.func @transform_2(%arg0: i32) -> (i32, i32) {
    %c0_i32 = arith.constant 0 : i32
    %c0_i32_0 = arith.constant 0 : i32
    return %arg0, %c0_i32 : i32, i32
  }
}

</mosaic_0001>

<llo_original>
// kernel: tpu_custom_call.1
$region0: #{tpu_custom_call.1}
  #allocation0 [shape = 'u32[]', space=smem, size = 0x4, offset = 0x4, fixed_abs, tag = 'smem constant byte address 0x4 - core index']
  #allocation1 [shape = 'u32[72,128]{1,0:T(1,128)}', space=vmem, size = 0x9000, scoped, tag = 'internal scratch']
  %s0 = inlined_call_operand.hbm [shape: s32[1,8,8], index: 0, kind: input, shape index: {}]
  %s1 = inlined_call_operand.hbm [shape: f32[96,128], index: 1, kind: input, shape index: {}]
  %s2 = inlined_call_operand.hbm [shape: f32[8,128], index: 2, kind: output, shape index: {}]
  %s3 = sld [smem:[#allocation0]]
  $region26: #{tpu_custom_call.1} parent=0
    _
  %s5 = ssub.s32 1, %s3
  %s6 = scalar_select 0, %s5, %s3
  $region1: #{tpu_custom_call.1} parent=0
    #allocation2 [shape = 'u8[4096]{0}', space=vmem, size = 0x1000, scoped, tag = 'input window, operand 0, single buffered']
    #allocation3 [shape = 's32[1]{0}', space=sflag, size = 0x4, scoped, tag = 'scoped memory for tpu_custom_call.1']
    #allocation4 [shape = 's32[1]{0}', space=sflag, size = 0x4, scoped, tag = 'scoped memory for tpu_custom_call.1']
    #allocation5 [shape = 'u8[49152]{0}', space=vmem, size = 0xc000, scoped, tag = 'input window, operand 1, single buffered']
    #allocation6 [shape = 's32[1]{0}', space=sflag, size = 0x4, scoped, tag = 'scoped memory for tpu_custom_call.1']
    #allocation7 [shape = 'u8[4096]{0}', space=vmem, size = 0x1000, scoped, tag = 'output window, operand 0, single buffered']
    %7 = vsyncpa [#allocation3], 0
    %8 = vsyncpa [#allocation6], 0
    %9 = vsyncpa [#allocation4], 0
    // Predicated region
    $region2: #{tpu_custom_call.1} parent=1 // pred_check
      _
    $region3: #{tpu_custom_call.1} parent=1 // pred_check_branch
      %11 = sbr.rel (0) target = $region5
    $region4: #{tpu_custom_call.1} parent=1 // pred_region
      %13 = vsyncadd [#allocation3], 0
      %s15 = sshll.u32 %s0, 4
      %s16 = int_to_ptr.hbm [resolvable:$true] %s15
      %s17 = sshll.u32 [#allocation2], 4
      %s18 = int_to_ptr.vmem [resolvable:$true] %s17
      %20 = dma.hbm_to_vmem [thread:$0]  %s16, 128, %s18, [#allocation3]
    $region5: #{tpu_custom_call.1} parent=1 // pred_fallthru
      _
    // Predicated region
    $region6: #{tpu_custom_call.1} parent=1 // pred_check
      _
    $region7: #{tpu_custom_call.1} parent=1 // pred_check_branch
      %22 = sbr.rel (0) target = $region9
    $region8: #{tpu_custom_call.1} parent=1 // pred_region
      %24 = vsyncadd [#allocation6], 0
      %s25 = sshll.u32 %s1, 4
      %s26 = int_to_ptr.hbm [resolvable:$true] %s25
      %s27 = sshll.u32 [#allocation5], 4
      %s28 = int_to_ptr.vmem [resolvable:$true] %s27
      %33 = dma.hbm_to_vmem [thread:$0]  %s26, 1536, %s28, [#allocation6], 128, 128, 8
    $region9: #{tpu_custom_call.1} parent=1 // pred_fallthru
      _
    // Predicated region
    $region10: #{tpu_custom_call.1} parent=1 // pred_check
      _
    $region11: #{tpu_custom_call.1} parent=1 // pred_check_branch
      %35 = sbr.rel (0) target = $region13
    $region12: #{tpu_custom_call.1} parent=1 // pred_region
      %37 = dma.done [#allocation3], 128
    $region13: #{tpu_custom_call.1} parent=1 // pred_fallthru
      _
    // Predicated region
    $region14: #{tpu_custom_call.1} parent=1 // pred_check
      _
    $region15: #{tpu_custom_call.1} parent=1 // pred_check_branch
      %39 = sbr.rel (0) target = $region17
    $region16: #{tpu_custom_call.1} parent=1 // pred_region
      %41 = dma.done [#allocation6], 1536
    $region17: #{tpu_custom_call.1} parent=1 // pred_fallthru
      _
    %v42 = vld [vmem:[#allocation2] sm:$0xff]
    %v43 = vlaneseq
    %v44 = vand.u32 %v43, 127
    %45 = vset.pattern.permute.xlu0 0
    %46 = vperm.xlu0 %45, %v42
    %v47 = vpop.permute.xlu0 %46
    %vm48 = vcmp.eq.s32.totalorder %v44, %v47
    %49 = vset.pattern.permute.xlu0 4
    %50 = vperm.xlu0 %49, %v42
    %v51 = vpop.permute.xlu0 %50
    %vm52 = vcmp.eq.s32.totalorder %v44, %v51
    %vm53 = vmor %vm48, %vm52
    %54 = vset.pattern.permute.xlu0 1
    %55 = vperm.xlu0 %54, %v42
    %v56 = vpop.permute.xlu0 %55
    %vm57 = vcmp.eq.s32.totalorder %v44, %v56
    %vm58 = vmor %vm53, %vm57
    %59 = vset.pattern.permute.xlu0 5
    %60 = vperm.xlu0 %59, %v42
    %v61 = vpop.permute.xlu0 %60
    %vm62 = vcmp.eq.s32.totalorder %v44, %v61
    %vm63 = vmor %vm58, %vm62
    %64 = vset.pattern.permute.xlu0 2
    %65 = vperm.xlu0 %64, %v42
    %v66 = vpop.permute.xlu0 %65
    %vm67 = vcmp.eq.s32.totalorder %v44, %v66
    %vm68 = vmor %vm63, %vm67
    %69 = vset.pattern.permute.xlu0 6
    %70 = vperm.xlu0 %69, %v42
    %v71 = vpop.permute.xlu0 %70
    %vm72 = vcmp.eq.s32.totalorder %v44, %v71
    %vm73 = vmor %vm68, %vm72
    %74 = vset.pattern.permute.xlu0 3
    %75 = vperm.xlu0 %74, %v42
    %v76 = vpop.permute.xlu0 %75
    %vm77 = vcmp.eq.s32.totalorder %v44, %v76
    %vm78 = vmor %vm73, %vm77
    %79 = vset.pattern.permute.xlu0 7
    %80 = vperm.xlu0 %79, %v42
    %v81 = vpop.permute.xlu0 %80
    %vm82 = vcmp.eq.s32.totalorder %v44, %v81
    %vm83 = vmor %vm78, %vm82
    %v84 = vsel %vm83, 1, 0
    %v85 = vcvt.s32.f32 %v84
    %v86 = vld [vmem:[#allocation5] sm:$0xff]
    %v87 = vld [vmem:[#allocation5 + $0x8] sm:$0xff]
    %v88 = vld [vmem:[#allocation5 + $0x10] sm:$0xff]
    %v89 = vld [vmem:[#allocation5 + $0x18] sm:$0xff]
    %v90 = vld [vmem:[#allocation5 + $0x20] sm:$0xff]
    %v91 = vld [vmem:[#allocation5 + $0x28] sm:$0xff]
    %v92 = vld [vmem:[#allocation5 + $0x30] sm:$0xff]
    %v93 = vld [vmem:[#allocation5 + $0x38] sm:$0xff]
    %v94 = vld [vmem:[#allocation5 + $0x40] sm:$0xff]
    %v95 = vld [vmem:[#allocation5 + $0x48] sm:$0xff]
    %v96 = vld [vmem:[#allocation5 + $0x50] sm:$0xff]
    %v97 = vld [vmem:[#allocation5 + $0x58] sm:$0xff]
    %vm98 = vcmask 785408
    %v100 = vsel %vm98, %v85, 0
    %102 = vmatpush.msra.mxu0 0.0
    %103 = vmatpush.msra.mxu0 0.0
    %104 = vmatpush.msra.mxu0 0.0
    %105 = vmatpush.msra.mxu0 0.0
    %v106 = vand.u32 %v97, 4294901760
    %107 = vmatpush.msra.mxu0 %v106
    %v108 = vand.u32 %v96, 4294901760
    %109 = vmatpush.msra.mxu0 %v108
    %v110 = vand.u32 %v95, 4294901760
    %111 = vmatpush.msra.mxu0 %v110
    %v112 = vand.u32 %v94, 4294901760
    %113 = vmatpush.msra.mxu0 %v112
    %v114 = vand.u32 %v93, 4294901760
    %115 = vmatpush.msra.mxu0 %v114
    %v116 = vand.u32 %v92, 4294901760
    %117 = vmatpush.msra.mxu0 %v116
    %v118 = vand.u32 %v91, 4294901760
    %119 = vmatpush.msra.mxu0 %v118
    %v120 = vand.u32 %v90, 4294901760
    %121 = vmatpush.msra.mxu0 %v120
    %v122 = vand.u32 %v89, 4294901760
    %123 = vmatpush.msra.mxu0 %v122
    %v124 = vand.u32 %v88, 4294901760
    %125 = vmatpush.msra.mxu0 %v124
    %v126 = vand.u32 %v87, 4294901760
    %127 = vmatpush.msra.mxu0 %v126
    %v128 = vand.u32 %v86, 4294901760
    %129 = vmatpush.msra.mxu0 %v128
    %v130 = vand.u32 %v100, 4294901760
    %v131 = vsub.f32 %v100, %v130
    %v132 = vand.u32 %v131, 4294901760
    %v133 = vsub.f32 %v131, %v132
    %v134 = vand.u32 %v133, 4294901760
    %135 = vmatmul.f32.gmra.mxu0 %v134
    %v136 = vpop.f32.mrf.mxu0
    %v137 = vadd.f32 0.0, %v136
    %138 = vdwg.mxu0
    %139 = vmatpush.msra.mxu0 0.0
    %140 = vmatpush.msra.mxu0 0.0
    %141 = vmatpush.msra.mxu0 0.0
    %142 = vmatpush.msra.mxu0 0.0
    %v143 = vand.u32 %v97, 4294901760
    %v144 = vsub.f32 %v97, %v143
    %v145 = vand.u32 %v144, 4294901760
    %v146 = vsub.f32 %v144, %v145
    %v147 = vand.u32 %v146, 4294901760
    %148 = vmatpush.msra.mxu0 %v147
    %v149 = vand.u32 %v96, 4294901760
    %v150 = vsub.f32 %v96, %v149
    %v151 = vand.u32 %v150, 4294901760
    %v152 = vsub.f32 %v150, %v151
    %v153 = vand.u32 %v152, 4294901760
    %154 = vmatpush.msra.mxu0 %v153
    %v155 = vand.u32 %v95, 4294901760
    %v156 = vsub.f32 %v95, %v155
    %v157 = vand.u32 %v156, 4294901760
    %v158 = vsub.f32 %v156, %v157
    %v159 = vand.u32 %v158, 4294901760
    %160 = vmatpush.msra.mxu0 %v159
    %v161 = vand.u32 %v94, 4294901760
    %v162 = vsub.f32 %v94, %v161
    %v163 = vand.u32 %v162, 4294901760
    %v164 = vsub.f32 %v162, %v163
    %v165 = vand.u32 %v164, 4294901760
    %166 = vmatpush.msra.mxu0 %v165
    %v167 = vand.u32 %v93, 4294901760
    %v168 = vsub.f32 %v93, %v167
    %v169 = vand.u32 %v168, 4294901760
    %v170 = vsub.f32 %v168, %v169
    %v171 = vand.u32 %v170, 4294901760
    %172 = vmatpush.msra.mxu0 %v171
    %v173 = vand.u32 %v92, 4294901760
    %v174 = vsub.f32 %v92, %v173
    %v175 = vand.u32 %v174, 4294901760
    %v176 = vsub.f32 %v174, %v175
    %v177 = vand.u32 %v176, 4294901760
    %178 = vmatpush.msra.mxu0 %v177
    %v179 = vand.u32 %v91, 4294901760
    %v180 = vsub.f32 %v91, %v179
    %v181 = vand.u32 %v180, 4294901760
    %v182 = vsub.f32 %v180, %v181
    %v183 = vand.u32 %v182, 4294901760
    %184 = vmatpush.msra.mxu0 %v183
    %v185 = vand.u32 %v90, 4294901760
    %v186 = vsub.f32 %v90, %v185
    %v187 = vand.u32 %v186, 4294901760
    %v188 = vsub.f32 %v186, %v187
    %v189 = vand.u32 %v188, 4294901760
    %190 = vmatpush.msra.mxu0 %v189
    %v191 = vand.u32 %v89, 4294901760
    %v192 = vsub.f32 %v89, %v191
    %v193 = vand.u32 %v192, 4294901760
    %v194 = vsub.f32 %v192, %v193
    %v195 = vand.u32 %v194, 4294901760
    %196 = vmatpush.msra.mxu0 %v195
    %v197 = vand.u32 %v88, 4294901760
    %v198 = vsub.f32 %v88, %v197
    %v199 = vand.u32 %v198, 4294901760
    %v200 = vsub.f32 %v198, %v199
    %v201 = vand.u32 %v200, 4294901760
    %202 = vmatpush.msra.mxu0 %v201
    %v203 = vand.u32 %v87, 4294901760
    %v204 = vsub.f32 %v87, %v203
    %v205 = vand.u32 %v204, 4294901760
    %v206 = vsub.f32 %v204, %v205
    %v207 = vand.u32 %v206, 4294901760
    %208 = vmatpush.msra.mxu0 %v207
    %v209 = vand.u32 %v86, 4294901760
    %v210 = vsub.f32 %v86, %v209
    %v211 = vand.u32 %v210, 4294901760
    %v212 = vsub.f32 %v210, %v211
    %v213 = vand.u32 %v212, 4294901760
    %214 = vmatpush.msra.mxu0 %v213
    %v215 = vand.u32 %v100, 4294901760
    %216 = vmatmul.f32.gmra.mxu0 %v215
    %v217 = vpop.f32.mrf.mxu0
    %v218 = vadd.f32 %v137, %v217
    %219 = vdwg.mxu0
    %220 = vmatpush.msra.mxu0 0.0
    %221 = vmatpush.msra.mxu0 0.0
    %222 = vmatpush.msra.mxu0 0.0
    %223 = vmatpush.msra.mxu0 0.0
    %v224 = vand.u32 %v97, 4294901760
    %v225 = vsub.f32 %v97, %v224
    %226 = vmatpush.msra.mxu0 %v225
    %v227 = vand.u32 %v96, 4294901760
    %v228 = vsub.f32 %v96, %v227
    %229 = vmatpush.msra.mxu0 %v228
    %v230 = vand.u32 %v95, 4294901760
    %v231 = vsub.f32 %v95, %v230
    %232 = vmatpush.msra.mxu0 %v231
    %v233 = vand.u32 %v94, 4294901760
    %v234 = vsub.f32 %v94, %v233
    %235 = vmatpush.msra.mxu0 %v234
    %v236 = vand.u32 %v93, 4294901760
    %v237 = vsub.f32 %v93, %v236
    %238 = vmatpush.msra.mxu0 %v237
    %v239 = vand.u32 %v92, 4294901760
    %v240 = vsub.f32 %v92, %v239
    %241 = vmatpush.msra.mxu0 %v240
    %v242 = vand.u32 %v91, 4294901760
    %v243 = vsub.f32 %v91, %v242
    %244 = vmatpush.msra.mxu0 %v243
    %v245 = vand.u32 %v90, 4294901760
    %v246 = vsub.f32 %v90, %v245
    %247 = vmatpush.msra.mxu0 %v246
    %v248 = vand.u32 %v89, 4294901760
    %v249 = vsub.f32 %v89, %v248
    %250 = vmatpush.msra.mxu0 %v249
    %v251 = vand.u32 %v88, 4294901760
    %v252 = vsub.f32 %v88, %v251
    %253 = vmatpush.msra.mxu0 %v252
    %v254 = vand.u32 %v87, 4294901760
    %v255 = vsub.f32 %v87, %v254
    %256 = vmatpush.msra.mxu0 %v255
    %v257 = vand.u32 %v86, 4294901760
    %v258 = vsub.f32 %v86, %v257
    %259 = vmatpush.msra.mxu0 %v258
    %v260 = vand.u32 %v100, 4294901760
    %v261 = vsub.f32 %v100, %v260
    %262 = vmatmul.f32.gmra.mxu0 %v261
    %v263 = vpop.f32.mrf.mxu0
    %v264 = vadd.f32 %v218, %v263
    %265 = vdwg.mxu0
    %266 = vmatpush.msra.mxu0 0.0
    %267 = vmatpush.msra.mxu0 0.0
    %268 = vmatpush.msra.mxu0 0.0
    %269 = vmatpush.msra.mxu0 0.0
    %v270 = vand.u32 %v97, 4294901760
    %271 = vmatpush.msra.mxu0 %v270
    %v272 = vand.u32 %v96, 4294901760
    %273 = vmatpush.msra.mxu0 %v272
    %v274 = vand.u32 %v95, 4294901760
    %275 = vmatpush.msra.mxu0 %v274
    %v276 = vand.u32 %v94, 4294901760
    %277 = vmatpush.msra.mxu0 %v276
    %v278 = vand.u32 %v93, 4294901760
    %279 = vmatpush.msra.mxu0 %v278
    %v280 = vand.u32 %v92, 4294901760
    %281 = vmatpush.msra.mxu0 %v280
    %v282 = vand.u32 %v91, 4294901760
    %283 = vmatpush.msra.mxu0 %v282
    %v284 = vand.u32 %v90, 4294901760
    %285 = vmatpush.msra.mxu0 %v284
    %v286 = vand.u32 %v89, 4294901760
    %287 = vmatpush.msra.mxu0 %v286
    %v288 = vand.u32 %v88, 4294901760
    %289 = vmatpush.msra.mxu0 %v288
    %v290 = vand.u32 %v87, 4294901760
    %291 = vmatpush.msra.mxu0 %v290
    %v292 = vand.u32 %v86, 4294901760
    %293 = vmatpush.msra.mxu0 %v292
    %v294 = vand.u32 %v100, 4294901760
    %v295 = vsub.f32 %v100, %v294
    %v296 = vand.u32 %v295, 4294901760
    %297 = vmatmul.f32.gmra.mxu0 %v296
    %v298 = vpop.f32.mrf.mxu0
    %v299 = vadd.f32 %v264, %v298
    %300 = vdwg.mxu0
    %301 = vmatpush.msra.mxu0 0.0
    %302 = vmatpush.msra.mxu0 0.0
    %303 = vmatpush.msra.mxu0 0.0
    %304 = vmatpush.msra.mxu0 0.0
    %v305 = vand.u32 %v97, 4294901760
    %v306 = vsub.f32 %v97, %v305
    %v307 = vand.u32 %v306, 4294901760
    %308 = vmatpush.msra.mxu0 %v307
    %v309 = vand.u32 %v96, 4294901760
    %v310 = vsub.f32 %v96, %v309
    %v311 = vand.u32 %v310, 4294901760
    %312 = vmatpush.msra.mxu0 %v311
    %v313 = vand.u32 %v95, 4294901760
    %v314 = vsub.f32 %v95, %v313
    %v315 = vand.u32 %v314, 4294901760
    %316 = vmatpush.msra.mxu0 %v315
    %v317 = vand.u32 %v94, 4294901760
    %v318 = vsub.f32 %v94, %v317
    %v319 = vand.u32 %v318, 4294901760
    %320 = vmatpush.msra.mxu0 %v319
    %v321 = vand.u32 %v93, 4294901760
    %v322 = vsub.f32 %v93, %v321
    %v323 = vand.u32 %v322, 4294901760
    %324 = vmatpush.msra.mxu0 %v323
    %v325 = vand.u32 %v92, 4294901760
    %v326 = vsub.f32 %v92, %v325
    %v327 = vand.u32 %v326, 4294901760
    %328 = vmatpush.msra.mxu0 %v327
    %v329 = vand.u32 %v91, 4294901760
    %v330 = vsub.f32 %v91, %v329
    %v331 = vand.u32 %v330, 4294901760
    %332 = vmatpush.msra.mxu0 %v331
    %v333 = vand.u32 %v90, 4294901760
    %v334 = vsub.f32 %v90, %v333
    %v335 = vand.u32 %v334, 4294901760
    %336 = vmatpush.msra.mxu0 %v335
    %v337 = vand.u32 %v89, 4294901760
    %v338 = vsub.f32 %v89, %v337
    %v339 = vand.u32 %v338, 4294901760
    %340 = vmatpush.msra.mxu0 %v339
    %v341 = vand.u32 %v88, 4294901760
    %v342 = vsub.f32 %v88, %v341
    %v343 = vand.u32 %v342, 4294901760
    %344 = vmatpush.msra.mxu0 %v343
    %v345 = vand.u32 %v87, 4294901760
    %v346 = vsub.f32 %v87, %v345
    %v347 = vand.u32 %v346, 4294901760
    %348 = vmatpush.msra.mxu0 %v347
    %v349 = vand.u32 %v86, 4294901760
    %v350 = vsub.f32 %v86, %v349
    %v351 = vand.u32 %v350, 4294901760
    %352 = vmatpush.msra.mxu0 %v351
    %v353 = vand.u32 %v100, 4294901760
    %354 = vmatmul.f32.gmra.mxu0 %v353
    %v355 = vpop.f32.mrf.mxu0
    %v356 = vadd.f32 %v299, %v355
    %357 = vdwg.mxu0
    %358 = vmatpush.msra.mxu0 0.0
    %359 = vmatpush.msra.mxu0 0.0
    %360 = vmatpush.msra.mxu0 0.0
    %361 = vmatpush.msra.mxu0 0.0
    %v362 = vand.u32 %v97, 4294901760
    %363 = vmatpush.msra.mxu0 %v362
    %v364 = vand.u32 %v96, 4294901760
    %365 = vmatpush.msra.mxu0 %v364
    %v366 = vand.u32 %v95, 4294901760
    %367 = vmatpush.msra.mxu0 %v366
    %v368 = vand.u32 %v94, 4294901760
    %369 = vmatpush.msra.mxu0 %v368
    %v370 = vand.u32 %v93, 4294901760
    %371 = vmatpush.msra.mxu0 %v370
    %v372 = vand.u32 %v92, 4294901760
    %373 = vmatpush.msra.mxu0 %v372
    %v374 = vand.u32 %v91, 4294901760
    %375 = vmatpush.msra.mxu0 %v374
    %v376 = vand.u32 %v90, 4294901760
    %377 = vmatpush.msra.mxu0 %v376
    %v378 = vand.u32 %v89, 4294901760
    %379 = vmatpush.msra.mxu0 %v378
    %v380 = vand.u32 %v88, 4294901760
    %381 = vmatpush.msra.mxu0 %v380
    %v382 = vand.u32 %v87, 4294901760
    %383 = vmatpush.msra.mxu0 %v382
    %v384 = vand.u32 %v86, 4294901760
    %385 = vmatpush.msra.mxu0 %v384
    %v386 = vand.u32 %v100, 4294901760
    %387 = vmatmul.f32.gmra.mxu0 %v386
    %v388 = vpop.f32.mrf.mxu0
    %v389 = vadd.f32 %v356, %v388
    %390 = vdwg.mxu0
    %391 = vst [vmem:[#allocation7] sm:$0xff] %v389
    // Predicated region
    $region18: #{tpu_custom_call.1} parent=1 // pred_check
      _
    $region19: #{tpu_custom_call.1} parent=1 // pred_check_branch
      %393 = sbr.rel (0) target = $region21
    $region20: #{tpu_custom_call.1} parent=1 // pred_region
      %395 = vsyncadd [#allocation4], 0
      %s397 = sshll.u32 [#allocation7], 4
      %s398 = int_to_ptr.vmem [resolvable:$true] %s397
      %s399 = sshll.u32 %s2, 4
      %s400 = int_to_ptr.hbm [resolvable:$true] %s399
      %402 = dma.vmem_to_hbm [thread:$0]  %s398, 128, %s400, [#allocation4]
    $region21: #{tpu_custom_call.1} parent=1 // pred_fallthru
      _
    // Predicated region
    $region22: #{tpu_custom_call.1} parent=1 // pred_check
      _
    $region23: #{tpu_custom_call.1} parent=1 // pred_check_branch
      %404 = sbr.rel (0) target = $region25
    $region24: #{tpu_custom_call.1} parent=1 // pred_region
      %406 = dma.done [#allocation4], 128
    $region25: #{tpu_custom_call.1} parent=1 // pred_fallthru
      _
    %407 = vsyncpa [#allocation3], 1
    %408 = vsyncpa [#allocation6], 1
    %409 = vsyncpa [#allocation4], 1

</llo_original>
